<compile_context>
chip_gen: v6e
topology: v6e:2x2x1
jax: 0.10.0
libtpu: 0.0.40
codegen_flags: <defaults>
</compile_context>

<pallas_src>
import functools
import math

import jax
import jax.numpy as jnp
from jax.experimental import pallas as pl
from jax.experimental.pallas import tpu as pltpu

EPS = 1e-8  # torch.nn.CosineSimilarity default eps


def _cosine_sim_kernel(x_ref, y_ref, o_ref, *, inv_temp, strip):
    """x_ref, y_ref: (TR, H) VMEM tiles; o_ref: (TR, 1).

    Strip-mined so the f32 widening and the three products live only in
    vregs, never as whole-tile VMEM temporaries.
    """
    n_strips = x_ref.shape[0] // strip

    def body(s, carry):
        i = pl.multiple_of(s * strip, strip)
        x = x_ref[pl.ds(i, strip), :].astype(jnp.float32)
        y = y_ref[pl.ds(i, strip), :].astype(jnp.float32)
        dot = jnp.sum(x * y, axis=-1, keepdims=True)   # (strip, 1)
        nx2 = jnp.sum(x * x, axis=-1, keepdims=True)   # ||x||^2
        ny2 = jnp.sum(y * y, axis=-1, keepdims=True)   # ||y||^2
        # Single fused rsqrt on the EUP (its own VLIW slot -> ~free); 1/temp
        # folded into the same multiply chain.  eps^2 = 1e-16 is a normal
        # f32, so semantics match torch exactly.
        inv_norm = jax.lax.rsqrt(jnp.maximum(nx2 * ny2, EPS * EPS))
        o_ref[pl.ds(i, strip), :] = (dot * inv_norm * inv_temp).astype(o_ref.dtype)
        return carry

    jax.lax.fori_loop(0, n_strips, body, 0, unroll=min(8, n_strips))


def _round_up(v, m):
    return ((v + m - 1) // m) * m


def _choose_tile_rows(rows, hidden, itemsize, strip):
    # Memory-bound streaming: amortize the ~0.35us per-grid-step overhead
    # with ~4 MiB input blocks (the measured 85%+-of-HBM-roofline regime on
    # v5e/v6e) while keeping 2 inputs x 2 pipeline buffers well inside every
    # generation's scoped VMEM (v7x has only 64 MiB physical).
    target_block_bytes = 4 * 1024 * 1024
    tr = max(strip, target_block_bytes // max(1, hidden * itemsize))
    tr = (tr // strip) * strip
    tr = min(tr, 2048)                       # amortization saturates; cap VMEM
    if rows < strip:
        return rows                          # block == full row extent (legal)
    tr = min(tr, _round_up(rows, strip))
    tr = max(strip, tr)
    # v7x megacore: make sure the "parallel" row axis splits into >= 2 tiles
    # so neither TensorCore idles (on 1-TC v5e/v6e this only adds one cheap
    # extra grid step).
    if rows > strip and -(-rows // tr) < 2:
        tr = _round_up(-(-rows // 2), strip)
    return tr


def similarity(x, y, temp, *, tile_rows=None):
    """cosine_similarity(x, y, dim=-1) / temp  (the DPR/SimCSE Similarity module)."""
    if x.shape != y.shape:
        # TODO(synk): fuse broadcasting (e.g. SimCSE's (B,1,H) x (1,B,H)) into
        # the kernel instead of materializing the broadcast in HBM.
        shape = jnp.broadcast_shapes(x.shape, y.shape)
        x = jnp.broadcast_to(x, shape)
        y = jnp.broadcast_to(y, shape)

    *lead, H = x.shape
    R = math.prod(lead) if lead else 1
    out_dtype = jnp.promote_types(x.dtype, y.dtype)

    if H < 128:
        # Lane-sparse reduction: every vreg / DMA would be mostly padding, so
        # the pure-JAX path is at least as fast for these shapes.
        # TODO(synk): pack 128 // H logical rows per lane row instead.
        return similarity_ref(x, y, temp).astype(out_dtype)

    x2 = x.reshape(R, H)
    y2 = y.reshape(R, H)

    itemsize = max(x2.dtype.itemsize, y2.dtype.itemsize)
    strip = 8 * max(1, 4 // itemsize)        # 8 rows (f32) / 16 rows (bf16)
    if tile_rows is not None:
        tr = max(strip, _round_up(int(tile_rows), strip))
        tr = min(tr, _round_up(R, strip))
    else:
        tr = _choose_tile_rows(R, H, itemsize, strip)
    strip = min(strip, tr)
    assert tr % strip == 0
    num_tiles = -(-R // tr)                  # cdiv: last block may be partial

    # VMEM budget = double-buffered input blocks + output blocks + headroom;
    # the strip-mined kernel needs no whole-tile scratch of its own, so the
    # old 32/48 MiB floor/clamp is gone (important on 64 MiB-VMEM v7x).
    in_block_bytes = tr * H * itemsize
    out_block_bytes = tr * jnp.dtype(out_dtype).itemsize
    est = 2 * 2 * in_block_bytes + 2 * out_block_bytes
    vmem_limit = int(min(max(est + (4 << 20), 12 << 20), 32 << 20))

    kernel = functools.partial(
        _cosine_sim_kernel, inv_temp=1.0 / float(temp), strip=strip)

    # Note: the (TR, 1) output column is lane-sparse, but output traffic is
    # ~H x smaller than input traffic, so it is negligible here.
    out = pl.pallas_call(
        kernel,
        out_shape=jax.ShapeDtypeStruct((R, 1), out_dtype),
        grid_spec=pltpu.PrefetchScalarGridSpec(
            num_scalar_prefetch=0,
            grid=(num_tiles,),
            in_specs=[
                pl.BlockSpec((tr, H), lambda i: (i, 0)),
                pl.BlockSpec((tr, H), lambda i: (i, 0)),
            ],
            out_specs=pl.BlockSpec((tr, 1), lambda i: (i, 0)),
        ),
        compiler_params=pltpu.CompilerParams(
            # Row axis stays "parallel" so v7x shards the >= 2 tiles across
            # its two TensorCores.
            dimension_semantics=("parallel",),
            vmem_limit_bytes=vmem_limit,
        ),
    )(x2, y2)

    out = out[:, 0]
    return out.reshape(tuple(lead)) if lead else out.reshape(())


def similarity_ref(x, y, temp):
    # Pure-JAX reference mirroring torch.nn.CosineSimilarity(dim=-1) / temp.
    xf = x.astype(jnp.float32)
    yf = y.astype(jnp.float32)
    dot = jnp.sum(xf * yf, axis=-1)
    nx = jnp.sqrt(jnp.sum(xf * xf, axis=-1))
    ny = jnp.sqrt(jnp.sum(yf * yf, axis=-1))
    return dot / jnp.maximum(nx * ny, EPS) / temp


if __name__ == "__main__":
    # "Parameter" of the module: the temperature (deterministic, in-script).
    temp = 0.05

    # (batch, seq, hidden) inputs; hidden kept lane-dense (multiple of 128).
    B, S, H = 2, 8, 256
    key = jax.random.PRNGKey(0)
    kx, ky = jax.random.split(key)
    x = jax.random.normal(kx, (B, S, H), dtype=jnp.float32)
    y = jax.random.normal(ky, (B, S, H), dtype=jnp.float32)

    out = jax.block_until_ready(similarity(x, y, temp))
    ref = similarity_ref(x, y, temp)
    assert out.shape == (B, S), out.shape
    assert jnp.allclose(out, ref, atol=1e-4, rtol=1e-4), (
        float(jnp.max(jnp.abs(out - ref))))

    # Non-divisible row count (R = 15): exercises the masked partial last
    # block that replaced the old jnp.pad copy of both inputs.
    B2, S2, H2 = 3, 5, 256
    x2 = jax.random.normal(jax.random.PRNGKey(1), (B2, S2, H2), dtype=jnp.float32)
    y2 = jax.random.normal(jax.random.PRNGKey(2), (B2, S2, H2), dtype=jnp.float32)
    out2 = jax.block_until_ready(similarity(x2, y2, temp))
    ref2 = similarity_ref(x2, y2, temp)
    assert out2.shape == (B2, S2), out2.shape
    assert jnp.allclose(out2, ref2, atol=1e-4, rtol=1e-4), (
        float(jnp.max(jnp.abs(out2 - ref2))))

    # Small hidden dim -> lane-sparse pure-JAX fallback path.
    B3, S3, H3 = 2, 4, 32
    x3 = jax.random.normal(jax.random.PRNGKey(3), (B3, S3, H3), dtype=jnp.float32)
    y3 = jax.random.normal(jax.random.PRNGKey(4), (B3, S3, H3), dtype=jnp.float32)
    out3 = jax.block_until_ready(similarity(x3, y3, temp))
    ref3 = similarity_ref(x3, y3, temp)
    assert out3.shape == (B3, S3), out3.shape
    assert jnp.allclose(out3, ref3, atol=1e-4, rtol=1e-4)

    print("KERNEL_OK")
</pallas_src>

<mosaic_0001>
module attributes {stable_mosaic.version = 11 : i64} {
  func.func @_cosine_sim_kernel(%arg0: i32, %arg1: memref<8x256xf32, #tpu.memory_space<vmem>>, %arg2: memref<8x256xf32, #tpu.memory_space<vmem>>, %arg3: memref<8x1xf32, #tpu.memory_space<vmem>>) attributes {dimension_semantics = [#tpu.dimension_semantics<parallel>], iteration_bounds = array<i64: 2>, scalar_prefetch = 0 : i64, scratch_operands = 0 : i64, tpu.core_type = #tpu.core_type<tc>, window_params = [{transform_indices = @transform_0, window_bounds = array<i64: 8, 256>}, {transform_indices = @transform_1, window_bounds = array<i64: 8, 256>}, {transform_indices = @transform_2, window_bounds = array<i64: 8, 1>}]} {
    %c0_i32 = arith.constant 0 : i32
    %c8_i32 = arith.constant 8 : i32
    %0 = arith.muli %c0_i32, %c8_i32 : i32
    %1 = tpu.assume_multiple %0, 8 : i32
    %2 = arith.index_cast %1 : i32 to index
    %c0 = arith.constant 0 : index
    %3 = vector.load %arg1[%2, %c0] : memref<8x256xf32, #tpu.memory_space<vmem>>, vector<8x256xf32>
    %4 = arith.index_cast %1 : i32 to index
    %c0_0 = arith.constant 0 : index
    %5 = vector.load %arg2[%4, %c0_0] : memref<8x256xf32, #tpu.memory_space<vmem>>, vector<8x256xf32>
    %6 = arith.mulf %3, %5 : vector<8x256xf32>
    %cst = arith.constant dense<0.000000e+00> : vector<8xf32>
    %7 = vector.multi_reduction <add>, %6, %cst [1] : vector<8x256xf32> to vector<8xf32>
    %8 = vector.shape_cast %7 : vector<8xf32> to vector<8x1xf32>
    %9 = arith.mulf %3, %3 : vector<8x256xf32>
    %cst_1 = arith.constant dense<0.000000e+00> : vector<8xf32>
    %10 = vector.multi_reduction <add>, %9, %cst_1 [1] : vector<8x256xf32> to vector<8xf32>
    %11 = vector.shape_cast %10 : vector<8xf32> to vector<8x1xf32>
    %12 = arith.mulf %5, %5 : vector<8x256xf32>
    %cst_2 = arith.constant dense<0.000000e+00> : vector<8xf32>
    %13 = vector.multi_reduction <add>, %12, %cst_2 [1] : vector<8x256xf32> to vector<8xf32>
    %14 = vector.shape_cast %13 : vector<8xf32> to vector<8x1xf32>
    %15 = arith.mulf %11, %14 : vector<8x1xf32>
    %cst_3 = arith.constant 1.000000e-16 : f32
    %16 = vector.broadcast %cst_3 : f32 to vector<8x1xf32>
    %17 = arith.maximumf %15, %16 : vector<8x1xf32>
    %18 = math.rsqrt %17 : vector<8x1xf32>
    %19 = arith.mulf %8, %18 : vector<8x1xf32>
    %cst_4 = arith.constant 2.000000e+01 : f32
    %20 = vector.broadcast %cst_4 : f32 to vector<8x1xf32>
    %21 = arith.mulf %19, %20 : vector<8x1xf32>
    %22 = arith.index_cast %1 : i32 to index
    %c0_5 = arith.constant 0 : index
    %23 = vector.load %arg3[%22, %c0_5] : memref<8x1xf32, #tpu.memory_space<vmem>>, vector<8x1xf32>
    tpu.vector_store %arg3[%22, %c0_5], %21 {strides = array<i32>} : memref<8x1xf32, #tpu.memory_space<vmem>>, vector<8x1xf32>,
    %c1_i32 = arith.constant 1 : i32
    return
  }
  func.func @transform_0(%arg0: i32) -> (i32, i32) {
    %c0_i32 = arith.constant 0 : i32
    %c0_i32_0 = arith.constant 0 : i32
    return %arg0, %c0_i32 : i32, i32
  }
  func.func @transform_1(%arg0: i32) -> (i32, i32) {
    %c0_i32 = arith.constant 0 : i32
    %c0_i32_0 = arith.constant 0 : i32
    return %arg0, %c0_i32 : i32, i32
  }
  func.func @transform_2(%arg0: i32) -> (i32, i32) {
    %c0_i32 = arith.constant 0 : i32
    %c0_i32_0 = arith.constant 0 : i32
    return %arg0, %c0_i32 : i32, i32
  }
}

</mosaic_0001>

<llo_original>
// kernel: tpu_custom_call.1
$region0: #{tpu_custom_call.1}
  #allocation0 [shape = 'u32[]', space=smem, size = 0x4, offset = 0x4, fixed_abs, tag = 'smem constant byte address 0x4 - core index']
  #allocation1 [shape = 'u32[144,128]{1,0:T(1,128)}', space=vmem, size = 0x12000, scoped, tag = 'internal scratch']
  %s0 = inlined_call_operand.hbm [shape: f32[16,256], index: 0, kind: input, shape index: {}]
  %s1 = inlined_call_operand.hbm [shape: f32[16,256], index: 1, kind: input, shape index: {}]
  %s2 = inlined_call_operand.vmem [shape: f32[16,1], index: 2, kind: output, shape index: {}]
  %s3 = sld [smem:[#allocation0]]
  $region49: #{tpu_custom_call.1} parent=0
    _
  %s5 = ssub.s32 1, %s3
  %s6 = scalar_select 0, %s5, %s3
  $region1: #{tpu_custom_call.1} parent=0
    #allocation2 [shape = 'u8[16384]{0}', space=vmem, size = 0x4000, scoped, tag = 'input window, operand 0']
    #allocation3 [shape = 's32[2]{0}', space=sflag, size = 0x8, scoped, tag = 'scoped memory for tpu_custom_call.1']
    #allocation4 [shape = 'u8[16384]{0}', space=vmem, size = 0x4000, scoped, tag = 'input window, operand 1']
    #allocation5 [shape = 's32[2]{0}', space=sflag, size = 0x8, scoped, tag = 'scoped memory for tpu_custom_call.1']
    %7 = vsyncpa [#allocation3], 0
    %s8 = scalar_lea.sflag [#allocation3], 1
    %9 = vsyncpa %s8, 0
    %10 = vsyncpa [#allocation5], 0
    %s11 = scalar_lea.sflag [#allocation5], 1
    %12 = vsyncpa %s11, 0
    loop: start=0, step=1, limit=4
    $region2: #{tpu_custom_call.1} parent=1 // loop_pre_header
      _
    $region3: #{tpu_custom_call.1} parent=1 // loop_header
      %s14 = sphi 0, %s18
      %p15 = scmp.ge.s32.totalorder %s14, 4
      %s24 = sphi 0, %s26
      %s27 = sphi 0, %s24
      %s28 = sphi 0, %s27
      %s44 = sphi 0, %s28
      %s50 = sphi 0, %s52
      %s53 = sphi 0, %s50
      %s54 = sphi 0, %s53
      %s70 = sphi 0, %s54
      %s76 = sphi 0, %s78
      %s79 = sphi 0, %s76
      %s80 = sphi 0, %s79
      %s96 = sphi 0, %s80
    $region4: #{tpu_custom_call.1} parent=1 // loop_header_branch
      %17 = sbr.rel (%p15) target = $region8
    $region5: #{tpu_custom_call.1} parent=1 // loop_body
      %s19 = ssub.s32 %s14, 1
      %s20 = ssub.s32 %s14, 2
      %s21 = sadd.s32 %s14, 1
      %s22 = ssub.s32 %s14, %s21
      %p23 = scmp.eq.s32.totalorder %s22, 0
      %s25 = sadd.s32 %s24, 1
      %s26 = scalar_select %p23, %s24, %s25
      %p29 = pneg %p23
      %p30 = scmp.eq.s32.totalorder %s14, 1
      %p31 = por %p29, %p30
      %p32 = scmp.ne.s32.totalorder %s24, %s27
      %p33 = scmp.eq.s32.totalorder %s14, 0
      %p34 = por %p32, %p33
      %p35 = scmp.ne.s32.totalorder %s24, %s27
      %p36 = scmp.eq.s32.totalorder %s19, 1
      %p37 = por %p35, %p36
      %p38 = scmp.ne.s32.totalorder %s27, %s28
      %p39 = scmp.eq.s32.totalorder %s19, 0
      %p40 = por %p38, %p39
      %p41 = scmp.ne.s32.totalorder %s27, %s28
      %p42 = scmp.eq.s32.totalorder %s20, 1
      %p43 = por %p41, %p42
      %p45 = scmp.ne.s32.totalorder %s28, %s44
      %p46 = scmp.eq.s32.totalorder %s20, 0
      %p47 = por %p45, %p46
      %s48 = ssub.s32 %s14, %s21
      %p49 = scmp.eq.s32.totalorder %s48, 0
      %s51 = sadd.s32 %s50, 1
      %s52 = scalar_select %p49, %s50, %s51
      %p55 = pneg %p49
      %p56 = scmp.eq.s32.totalorder %s14, 1
      %p57 = por %p55, %p56
      %p58 = scmp.ne.s32.totalorder %s50, %s53
      %p59 = scmp.eq.s32.totalorder %s14, 0
      %p60 = por %p58, %p59
      %p61 = scmp.ne.s32.totalorder %s50, %s53
      %p62 = scmp.eq.s32.totalorder %s19, 1
      %p63 = por %p61, %p62
      %p64 = scmp.ne.s32.totalorder %s53, %s54
      %p65 = scmp.eq.s32.totalorder %s19, 0
      %p66 = por %p64, %p65
      %p67 = scmp.ne.s32.totalorder %s53, %s54
      %p68 = scmp.eq.s32.totalorder %s20, 1
      %p69 = por %p67, %p68
      %p71 = scmp.ne.s32.totalorder %s54, %s70
      %p72 = scmp.eq.s32.totalorder %s20, 0
      %p73 = por %p71, %p72
      %s74 = ssub.s32 %s14, %s21
      %p75 = scmp.eq.s32.totalorder %s74, 0
      %s77 = sadd.s32 %s76, 1
      %s78 = scalar_select %p75, %s76, %s77
      %p81 = pneg %p75
      %p82 = scmp.eq.s32.totalorder %s14, 1
      %p83 = por %p81, %p82
      %p84 = scmp.ne.s32.totalorder %s76, %s79
      %p85 = scmp.eq.s32.totalorder %s14, 0
      %p86 = por %p84, %p85
      %p87 = scmp.ne.s32.totalorder %s76, %s79
      %p88 = scmp.eq.s32.totalorder %s19, 1
      %p89 = por %p87, %p88
      %p90 = scmp.ne.s32.totalorder %s79, %s80
      %p91 = scmp.eq.s32.totalorder %s19, 0
      %p92 = por %p90, %p91
      %p93 = scmp.ne.s32.totalorder %s79, %s80
      %p94 = scmp.eq.s32.totalorder %s20, 1
      %p95 = por %p93, %p94
      %p97 = scmp.ne.s32.totalorder %s80, %s96
      %p98 = scmp.eq.s32.totalorder %s20, 0
      %p99 = por %p97, %p98
      %p100 = scmp.le.s32.totalorder 1, %s14
      %p101 = scmp.lt.s32.totalorder %s14, 3
      %p102 = pnand %p100, %p101
      %p103 = pneg %p102
      // Predicated region
      $region9: #{tpu_custom_call.1} parent=5 // pred_check
        _
      $region10: #{tpu_custom_call.1} parent=5 // pred_check_branch
        %105 = sbr.rel (%p102) target = $region12
      $region11: #{tpu_custom_call.1} parent=5 // pred_region
        %s106 = ssub.s32 %s14, 1
      $region12: #{tpu_custom_call.1} parent=5 // pred_fallthru
        _
      %p107 = scmp.lt.s32.totalorder %s14, 2
      // Predicated region
      $region13: #{tpu_custom_call.1} parent=5 // pred_check
        %p108 = pneg %p107
      $region14: #{tpu_custom_call.1} parent=5 // pred_check_branch
        %110 = sbr.rel (%p108) target = $region16
      $region15: #{tpu_custom_call.1} parent=5 // pred_region
        // Predicated region
        $region17: #{tpu_custom_call.1} parent=15 // pred_check
          %p111 = pneg %p34
        $region18: #{tpu_custom_call.1} parent=15 // pred_check_branch
          %113 = sbr.rel (%p111) target = $region20
        $region19: #{tpu_custom_call.1} parent=15 // pred_region
          %s114 = sand.u32 %s24, 1
          %s115 = scalar_lea.sflag [#allocation3], %s114
          %s116 = sand.u32 %s24, 1
          %s117 = smul.addr %s116, 16
          %s118 = scalar_lea.vmem [#allocation2], %s117
          %s120 = ssub.s32 256, 256
          %121 = vsyncadd %s115, %s120
          %s122 = smul.addr %s14, 2
          %s123 = smul.addr %s122, 128
          %s124 = scalar_lea.hbm %s0, %s123
          %s126 = sshll.u32 %s118, 4
          %s127 = int_to_ptr.vmem [resolvable:$true] %s126
          %129 = dma.hbm_to_vmem [thread:$0]  %s124, 256, %s127, %s115
        $region20: #{tpu_custom_call.1} parent=15 // pred_fallthru
          _
        // Predicated region
        $region21: #{tpu_custom_call.1} parent=15 // pred_check
          %p130 = pneg %p60
        $region22: #{tpu_custom_call.1} parent=15 // pred_check_branch
          %132 = sbr.rel (%p130) target = $region24
        $region23: #{tpu_custom_call.1} parent=15 // pred_region
          %s133 = sand.u32 %s50, 1
          %s134 = scalar_lea.sflag [#allocation5], %s133
          %s135 = sand.u32 %s50, 1
          %s136 = smul.addr %s135, 16
          %s137 = scalar_lea.vmem [#allocation4], %s136
          %s139 = ssub.s32 256, 256
          %140 = vsyncadd %s134, %s139
          %s141 = smul.addr %s14, 2
          %s142 = smul.addr %s141, 128
          %s143 = scalar_lea.hbm %s1, %s142
          %s145 = sshll.u32 %s137, 4
          %s146 = int_to_ptr.vmem [resolvable:$true] %s145
          %148 = dma.hbm_to_vmem [thread:$0]  %s143, 256, %s146, %s134
        $region24: #{tpu_custom_call.1} parent=15 // pred_fallthru
          _
      $region16: #{tpu_custom_call.1} parent=5 // pred_fallthru
        _
      %p149 = scmp.le.s32.totalorder 1, %s14
      %p150 = scmp.lt.s32.totalorder %s14, 3
      %p151 = pnand %p149, %p150
      %p152 = pneg %p151
      // Predicated region
      $region25: #{tpu_custom_call.1} parent=5 // pred_check
        _
      $region26: #{tpu_custom_call.1} parent=5 // pred_check_branch
        %154 = sbr.rel (%p151) target = $region28
      $region27: #{tpu_custom_call.1} parent=5 // pred_region
        %s155 = ssub.s32 %s14, 1
        %s156 = sand.u32 %s27, 1
        %s157 = scalar_lea.sflag [#allocation3], %s156
        %s158 = sand.u32 %s27, 1
        %s159 = smul.addr %s158, 16
        %s160 = scalar_lea.vmem [#allocation2], %s159
        // Predicated region
        $region29: #{tpu_custom_call.1} parent=27 // pred_check
          %p161 = pneg %p40
        $region30: #{tpu_custom_call.1} parent=27 // pred_check_branch
          %163 = sbr.rel (%p161) target = $region32
        $region31: #{tpu_custom_call.1} parent=27 // pred_region
          %164 = dma.done %s157, 256
        $region32: #{tpu_custom_call.1} parent=27 // pred_fallthru
          _
        %s165 = sand.u32 %s53, 1
        %s166 = scalar_lea.sflag [#allocation5], %s165
        %s167 = sand.u32 %s53, 1
        %s168 = smul.addr %s167, 16
        %s169 = scalar_lea.vmem [#allocation4], %s168
        // Predicated region
        $region33: #{tpu_custom_call.1} parent=27 // pred_check
          %p170 = pneg %p66
        $region34: #{tpu_custom_call.1} parent=27 // pred_check_branch
          %172 = sbr.rel (%p170) target = $region36
        $region35: #{tpu_custom_call.1} parent=27 // pred_region
          %173 = dma.done %s166, 256
        $region36: #{tpu_custom_call.1} parent=27 // pred_fallthru
          _
        %s174 = sand.u32 %s27, 1
        %s175 = scalar_lea.sflag [#allocation3], %s174
        %s176 = sand.u32 %s27, 1
        %s177 = smul.addr %s176, 16
        %s178 = scalar_lea.vmem [#allocation2], %s177
        %p179 = pneg %p40
        %p180 = pneg %p37
        %s181 = sand.u32 %s53, 1
        %s182 = scalar_lea.sflag [#allocation5], %s181
        %s183 = sand.u32 %s53, 1
        %s184 = smul.addr %s183, 16
        %s185 = scalar_lea.vmem [#allocation4], %s184
        %p186 = pneg %p66
        %p187 = pneg %p63
        %p188 = pneg %p92
        %p189 = pneg %p89
        %p190 = scmp.lt.s32.totalorder %s19, 1
        %s191 = scalar_select %p190, %s19, 1
        %s192 = smul.addr %s191, 8
        %s193 = scalar_lea.vmem %s2, %s192
        %p194 = scmp.lt.s32.totalorder %s19, 1
        %s195 = scalar_select %p194, %s19, 1
        %s196 = smul.addr %s195, 8
        %s197 = scalar_lea.vmem %s2, %s196
        %s198 = smul.u32 0, 2
        %s199 = smul.addr %s198, 8
        %s200 = scalar_lea.vmem %s160, %s199 [#allocation2]
        %v201 = vld [vmem:[%s200] sm:$0xff]
        %v202 = vld [vmem:[%s200 + $0x8] sm:$0xff]
        %s203 = smul.addr %s198, 8
        %s204 = scalar_lea.vmem %s169, %s203 [#allocation4]
        %v205 = vld [vmem:[%s204] sm:$0xff]
        %v206 = vld [vmem:[%s204 + $0x8] sm:$0xff]
        %v207 = vmul.f32 %v201, %v205
        %v208 = vmul.f32 %v202, %v206
        %v209 = vadd.f32 %v207, %v208
        %210 = vadd.xlane.f32.xlu0 %v209
        %v211 = vpop.xlane.xlu0 %210
        %v212 = vmul.f32 %v201, %v201
        %v213 = vmul.f32 %v202, %v202
        %v214 = vadd.f32 %v212, %v213
        %215 = vadd.xlane.f32.xlu0 %v214
        %v216 = vpop.xlane.xlu0 %215
        %v217 = vmul.f32 %v205, %v205
        %v218 = vmul.f32 %v206, %v206
        %v219 = vadd.f32 %v217, %v218
        %220 = vadd.xlane.f32.xlu0 %v219
        %v221 = vpop.xlane.xlu0 %220
        %v222 = vmul.f32 %v216, %v221
        %v223 = vmax.f32 %v222, 1e-16
        %v224 = vrsqrt.pop %v223
        %v225 = vmul.f32 %v211, %v224
        %v226 = vmul.f32 %v225, 20.0
        %vm227 = vcmask 7168
        %228 = vst.msk [vmem:[%s197] sm:$0xff] %vm227, %v226
        %p229 = scmp.lt.s32.totalorder %s19, 1
        %s230 = scalar_select %p229, %s19, 1
        %s231 = smul.addr %s230, 8
        %s232 = scalar_lea.vmem %s2, %s231
        // Predicated region
        $region37: #{tpu_custom_call.1} parent=27 // pred_check
          %p233 = pneg %p89
        $region38: #{tpu_custom_call.1} parent=27 // pred_check_branch
          %235 = sbr.rel (%p233) target = $region40
        $region39: #{tpu_custom_call.1} parent=27 // pred_region
          _
        $region40: #{tpu_custom_call.1} parent=27 // pred_fallthru
          _
      $region28: #{tpu_custom_call.1} parent=5 // pred_fallthru
        _
      %p236 = scmp.le.s32.totalorder 2, %s14
      // Predicated region
      $region41: #{tpu_custom_call.1} parent=5 // pred_check
        %p237 = pneg %p236
      $region42: #{tpu_custom_call.1} parent=5 // pred_check_branch
        %239 = sbr.rel (%p237) target = $region44
      $region43: #{tpu_custom_call.1} parent=5 // pred_region
        %s240 = ssub.s32 %s14, 2
        // Predicated region
        $region45: #{tpu_custom_call.1} parent=43 // pred_check
          %p241 = pneg %p95
        $region46: #{tpu_custom_call.1} parent=43 // pred_check_branch
          %243 = sbr.rel (%p241) target = $region48
        $region47: #{tpu_custom_call.1} parent=43 // pred_region
          %p244 = scmp.lt.s32.totalorder %s20, 1
          %s245 = scalar_select %p244, %s20, 1
          %s246 = smul.addr %s245, 8
          %s247 = scalar_lea.vmem %s2, %s246
        $region48: #{tpu_custom_call.1} parent=43 // pred_fallthru
          _
      $region44: #{tpu_custom_call.1} parent=5 // pred_fallthru
        _
    $region6: #{tpu_custom_call.1} parent=1 // loop_footer
      %s18 = sadd.s32 1, %s14
    $region7: #{tpu_custom_call.1} parent=1 // loop_footer_branch
      %13 = sbr.rel target = $region3
    $region8: #{tpu_custom_call.1} parent=1 // loop_exit
      _
    %248 = vsyncpa [#allocation3], 1
    %s249 = scalar_lea.sflag [#allocation3], 1
    %250 = vsyncpa %s249, 1
    %251 = vsyncpa [#allocation5], 1
    %s252 = scalar_lea.sflag [#allocation5], 1
    %253 = vsyncpa %s252, 1

</llo_original>
